<compile_context>
chip_gen: v7x
topology: tpu7x:2x2x1
jax: 0.10.0
libtpu: 0.0.40
codegen_flags: <defaults>
</compile_context>

<pallas_src>
import functools

import jax
import jax.numpy as jnp
from jax import lax
from jax.experimental import pallas as pl
from jax.experimental.pallas import tpu as pltpu
import numpy as np

_LANES = 128
_SUBLANES = 8


def _mtl_kernel(p0_ref, t0_ref, p1_ref, t1_ref,   # (blk, 128) f32 VMEM tiles
                out_ref,                          # (1, 8, 128) per-core partial-sum tile
                bce_acc, sq_acc,                  # (8, 128) f32 vreg accumulators
                *, n_true, blk, tiles_per_core):
    c = pl.program_id(0)          # TensorCore split ("parallel")
    t = pl.program_id(1)          # streaming / reduction axis ("arbitrary")

    @pl.when(t == 0)
    def _init():
        bce_acc[...] = jnp.zeros_like(bce_acc)
        sq_acc[...] = jnp.zeros_like(sq_acc)

    # Logical (unclamped) tile index -> flat element offset of this tile.
    tile_global = c * tiles_per_core + t
    tile_start = tile_global * (blk * _LANES)
    tile_end = tile_start + blk * _LANES

    def accumulate(mask):
        x0 = p0_ref[...]
        y0 = t0_ref[...]
        # Numerically-stable BCE-with-logits, matches torch.nn.BCEWithLogitsLoss.
        bce = jnp.maximum(x0, 0.0) - x0 * y0 + jnp.log1p(jnp.exp(-jnp.abs(x0)))
        d = p1_ref[...] - t1_ref[...]
        sq = d * d
        if mask is not None:
            bce = jnp.where(mask, bce, 0.0)
            sq = jnp.where(mask, sq, 0.0)
        # vreg-wise partial sums: (blk,128) -> (blk//8, 8, 128) -> VALU adds into (8,128).
        bce_acc[...] += jnp.sum(bce.reshape(-1, _SUBLANES, _LANES), axis=0)
        sq_acc[...] += jnp.sum(sq.reshape(-1, _SUBLANES, _LANES), axis=0)

    # Only the tail tile(s) pay the iota/compare/select masking cost.
    needs_mask = tile_end > n_true

    @pl.when(needs_mask)
    def _masked():
        row_ids = lax.broadcasted_iota(jnp.int32, (blk, _LANES), 0)
        lane_ids = lax.broadcasted_iota(jnp.int32, (blk, _LANES), 1)
        flat_idx = tile_start + row_ids * _LANES + lane_ids
        accumulate(flat_idx < n_true)

    @pl.when(jnp.logical_not(needs_mask))
    def _unmasked():
        accumulate(None)

    # Finalize once per core: single cross-lane reduction, lane-dense output tile.
    @pl.when(t == pl.num_programs(1) - 1)
    def _finalize():
        bce_sum = jnp.sum(bce_acc[...])
        sq_sum = jnp.sum(sq_acc[...])
        lane = lax.broadcasted_iota(jnp.int32, (1, _SUBLANES, _LANES), 2)
        row = jnp.where(lane == 0, bce_sum, 0.0)
        row = jnp.where(lane == 1, sq_sum, row)
        out_ref[...] = row


def multi_task_loss(predictions, targets, log_vars, *, block_rows=4096):
    """predictions/targets: lists of two arrays (B,1)/(B,). Returns (total, [ctr, mse])."""
    p0 = jnp.reshape(predictions[0], (-1,)).astype(jnp.float32)
    t0 = jnp.reshape(targets[0], (-1,)).astype(jnp.float32)
    p1 = jnp.reshape(predictions[1], (-1,)).astype(jnp.float32)
    t1 = jnp.reshape(targets[1], (-1,)).astype(jnp.float32)
    b = p0.shape[0]

    # Lane+sublane-dense layout: pad (only) up to the next multiple of 8*128 elements.
    row_block_elems = _SUBLANES * _LANES                    # 1024
    padded = -(-b // row_block_elems) * row_block_elems
    rows = padded // _LANES                                 # multiple of 8

    def to2d(x):
        if padded != b:                                     # pad-free fast path otherwise
            x = jnp.pad(x, (0, padded - b))
        return x.reshape(rows, _LANES)

    p0p, t0p, p1p, t1p = to2d(p0), to2d(t0), to2d(p1), to2d(t1)

    blk = min(block_rows, rows)                             # multiple of 8
    total_tiles = -(-rows // blk)                           # last tile may be partial
    tiles_per_core = -(-total_tiles // 2)                   # 2-way TensorCore split

    def in_map(c, t):
        # Clamp so an over-hanging duplicate tile (odd tile count) re-reads the last real
        # block; the kernel's flat-index mask discards it entirely.
        return (jnp.minimum(c * tiles_per_core + t, total_tiles - 1), 0)

    tile_spec = pl.BlockSpec((blk, _LANES), in_map)
    kernel = functools.partial(_mtl_kernel, n_true=b, blk=blk,
                               tiles_per_core=tiles_per_core)

    out = pl.pallas_call(
        kernel,
        out_shape=jax.ShapeDtypeStruct((2, _SUBLANES, _LANES), jnp.float32),
        grid_spec=pltpu.PrefetchScalarGridSpec(
            num_scalar_prefetch=0,
            grid=(2, tiles_per_core),
            in_specs=[tile_spec, tile_spec, tile_spec, tile_spec],
            out_specs=pl.BlockSpec((1, _SUBLANES, _LANES), lambda c, t: (c, 0, 0)),
            scratch_shapes=[pltpu.VMEM((_SUBLANES, _LANES), jnp.float32),
                            pltpu.VMEM((_SUBLANES, _LANES), jnp.float32)],
        ),
        compiler_params=pltpu.CompilerParams(
            dimension_semantics=("parallel", "arbitrary"),
            vmem_limit_bytes=32 * 1024 * 1024),
    )(p0p, t0p, p1p, t1p)

    # Cheap scalar finalize in plain JAX: combine the per-core partial sums.
    n_f = jnp.float32(b)
    ctr = (out[0, 0, 0] + out[1, 0, 0]) / n_f
    mse = (out[0, 0, 1] + out[1, 0, 1]) / n_f
    lv = log_vars.astype(jnp.float32)
    total = jnp.exp(-lv[0]) * ctr + lv[0] + jnp.exp(-lv[1]) * mse + lv[1]
    return total, [ctr, mse]


def _reference(predictions, targets, log_vars):
    """Pure-JAX reference mirroring the PyTorch forward."""
    x0 = jnp.squeeze(predictions[0]).astype(jnp.float32)
    y0 = targets[0].astype(jnp.float32)
    bce = jnp.mean(jnp.maximum(x0, 0.0) - x0 * y0 + jnp.log1p(jnp.exp(-jnp.abs(x0))))
    x1 = jnp.squeeze(predictions[1]).astype(jnp.float32)
    y1 = targets[1].astype(jnp.float32)
    mse = jnp.mean((x1 - y1) ** 2)
    lv = log_vars.astype(jnp.float32)
    total = jnp.exp(-lv[0]) * bce + lv[0] + jnp.exp(-lv[1]) * mse + lv[1]
    return total, [bce, mse]


def _make_inputs(key, batch):
    k0, k1, k2, k3 = jax.random.split(key, 4)
    pred_ctr = jax.random.normal(k0, (batch, 1), dtype=jnp.float32)            # CTR logits
    targ_ctr = jax.random.bernoulli(k1, 0.5, (batch,)).astype(jnp.float32)     # binary labels
    pred_rating = jax.random.normal(k2, (batch, 1), dtype=jnp.float32) * 2.0 + 3.0
    targ_rating = jax.random.uniform(k3, (batch,), dtype=jnp.float32,
                                     minval=1.0, maxval=5.0)                   # ratings
    return [pred_ctr, pred_rating], [targ_ctr, targ_rating]


def _check(predictions, targets, log_vars, **kw):
    total, losses = multi_task_loss(predictions, targets, log_vars, **kw)
    total = jax.block_until_ready(total)
    losses = [jax.block_until_ready(l) for l in losses]
    ref_total, ref_losses = _reference(predictions, targets, log_vars)
    np.testing.assert_allclose(np.asarray(total), np.asarray(ref_total),
                               rtol=1e-4, atol=1e-5)
    np.testing.assert_allclose(np.asarray(losses[0]), np.asarray(ref_losses[0]),
                               rtol=1e-4, atol=1e-5)
    np.testing.assert_allclose(np.asarray(losses[1]), np.asarray(ref_losses[1]),
                               rtol=1e-4, atol=1e-5)


if __name__ == "__main__":
    num_tasks = 2
    # Deterministic parameter init (matches nn.Parameter(torch.zeros(num_tasks))).
    log_vars = jnp.zeros((num_tasks,), dtype=jnp.float32)
    key = jax.random.PRNGKey(0)

    # Case 1: tiny batch (B=8) — single tile, heavy tail masking, core-1 duplicate masked.
    preds, targs = _make_inputs(key, 8)
    _check(preds, targs, log_vars)

    # Case 2: batch not a multiple of 128 — mask inside a tile.
    preds, targs = _make_inputs(jax.random.fold_in(key, 1), 300)
    _check(preds, targs, log_vars)

    # Case 3: B % 1024 == 0 — pad-free fast path (reshape only, no HBM copy).
    preds, targs = _make_inputs(jax.random.fold_in(key, 2), 2048)
    _check(preds, targs, log_vars)

    # Case 4: multiple tiles with odd tile count — clamped duplicate tile on core 1.
    preds, targs = _make_inputs(jax.random.fold_in(key, 3), 3000)
    _check(preds, targs, log_vars, block_rows=8)

    # Case 5: partial final block — out-of-bounds garbage discarded by the mask.
    preds, targs = _make_inputs(jax.random.fold_in(key, 4), 3000)
    _check(preds, targs, log_vars, block_rows=16)

    # Case 6: even core split, no masking anywhere (exact boundary).
    preds, targs = _make_inputs(jax.random.fold_in(key, 5), 4096)
    _check(preds, targs, log_vars, block_rows=8)

    print("KERNEL_OK")
</pallas_src>

<mosaic_0001>
module attributes {stable_mosaic.version = 11 : i64} {
  func.func @_mtl_kernel(%arg0: i32, %arg1: i32, %arg2: memref<8x128xf32, #tpu.memory_space<vmem>>, %arg3: memref<8x128xf32, #tpu.memory_space<vmem>>, %arg4: memref<8x128xf32, #tpu.memory_space<vmem>>, %arg5: memref<8x128xf32, #tpu.memory_space<vmem>>, %arg6: memref<1x8x128xf32, #tpu.memory_space<vmem>>, %arg7: memref<8x128xf32, #tpu.memory_space<vmem>>, %arg8: memref<8x128xf32, #tpu.memory_space<vmem>>) attributes {dimension_semantics = [#tpu.dimension_semantics<parallel>, #tpu.dimension_semantics<arbitrary>], iteration_bounds = array<i64: 2, 1>, scalar_prefetch = 0 : i64, scratch_operands = 2 : i64, tpu.core_type = #tpu.core_type<tc>, window_params = [{transform_indices = @transform_0, window_bounds = array<i64: 8, 128>}, {transform_indices = @transform_1, window_bounds = array<i64: 8, 128>}, {transform_indices = @transform_2, window_bounds = array<i64: 8, 128>}, {transform_indices = @transform_3, window_bounds = array<i64: 8, 128>}, {transform_indices = @transform_4, window_bounds = array<i64: 1, 8, 128>}]} {
    %c0_i32 = arith.constant 0 : i32
    %0 = arith.cmpi eq, %arg1, %c0_i32 : i32
    %1 = arith.extui %0 : i1 to i32
    %c0_i32_0 = arith.constant 0 : i32
    %2 = arith.cmpi ne, %1, %c0_i32_0 : i32
    scf.if %2 {
      %cst = arith.constant 0.000000e+00 : f32
      %16 = vector.broadcast %cst : f32 to vector<8x128xf32>
      %c0 = arith.constant 0 : index
      %c0_6 = arith.constant 0 : index
      %17 = vector.load %arg7[%c0, %c0_6] : memref<8x128xf32, #tpu.memory_space<vmem>>, vector<8x128xf32>
      tpu.vector_store %arg7[%c0, %c0_6], %16 {strides = array<i32>} : memref<8x128xf32, #tpu.memory_space<vmem>>, vector<8x128xf32>,
      %cst_7 = arith.constant 0.000000e+00 : f32
      %18 = vector.broadcast %cst_7 : f32 to vector<8x128xf32>
      %c0_8 = arith.constant 0 : index
      %c0_9 = arith.constant 0 : index
      %19 = vector.load %arg8[%c0_8, %c0_9] : memref<8x128xf32, #tpu.memory_space<vmem>>, vector<8x128xf32>
      tpu.vector_store %arg8[%c0_8, %c0_9], %18 {strides = array<i32>} : memref<8x128xf32, #tpu.memory_space<vmem>>, vector<8x128xf32>,
    } else {
    }
    %c1_i32 = arith.constant 1 : i32
    %3 = arith.muli %arg0, %c1_i32 : i32
    %4 = arith.addi %3, %arg1 : i32
    %c1024_i32 = arith.constant 1024 : i32
    %5 = arith.muli %4, %c1024_i32 : i32
    %c1024_i32_1 = arith.constant 1024 : i32
    %6 = arith.addi %5, %c1024_i32_1 : i32
    %c8_i32 = arith.constant 8 : i32
    %7 = arith.cmpi sgt, %6, %c8_i32 : i32
    %8 = arith.extui %7 : i1 to i32
    %c0_i32_2 = arith.constant 0 : i32
    %9 = arith.cmpi ne, %8, %c0_i32_2 : i32
    scf.if %9 {
      %16 = tpu.iota {dimensions = array<i32: 0>} : vector<8x128xi32>
      %17 = tpu.iota {dimensions = array<i32: 1>} : vector<8x128xi32>
      %c128_i32 = arith.constant 128 : i32
      %18 = vector.broadcast %c128_i32 : i32 to vector<8x128xi32>
      %19 = arith.muli %16, %18 : vector<8x128xi32>
      %20 = vector.broadcast %5 : i32 to vector<8x128xi32>
      %21 = arith.addi %20, %19 : vector<8x128xi32>
      %22 = arith.addi %21, %17 : vector<8x128xi32>
      %c8_i32_6 = arith.constant 8 : i32
      %23 = vector.broadcast %c8_i32_6 : i32 to vector<8x128xi32>
      %24 = arith.cmpi slt, %22, %23 : vector<8x128xi32>
      %c0 = arith.constant 0 : index
      %c0_7 = arith.constant 0 : index
      %25 = vector.load %arg2[%c0, %c0_7] : memref<8x128xf32, #tpu.memory_space<vmem>>, vector<8x128xf32>
      %c0_8 = arith.constant 0 : index
      %c0_9 = arith.constant 0 : index
      %26 = vector.load %arg3[%c0_8, %c0_9] : memref<8x128xf32, #tpu.memory_space<vmem>>, vector<8x128xf32>
      %cst = arith.constant 0.000000e+00 : f32
      %27 = vector.broadcast %cst : f32 to vector<8x128xf32>
      %28 = arith.maximumf %25, %27 : vector<8x128xf32>
      %29 = arith.mulf %25, %26 : vector<8x128xf32>
      %30 = arith.subf %28, %29 : vector<8x128xf32>
      %31 = math.absf %25 : vector<8x128xf32>
      %cst_10 = arith.constant 0.000000e+00 : f32
      %32 = vector.broadcast %cst_10 : f32 to vector<8x128xf32>
      %33 = arith.subf %32, %31 : vector<8x128xf32>
      %34 = math.exp %33 : vector<8x128xf32>
      %35 = math.log1p %34 : vector<8x128xf32>
      %36 = arith.addf %30, %35 : vector<8x128xf32>
      %c0_11 = arith.constant 0 : index
      %c0_12 = arith.constant 0 : index
      %37 = vector.load %arg4[%c0_11, %c0_12] : memref<8x128xf32, #tpu.memory_space<vmem>>, vector<8x128xf32>
      %c0_13 = arith.constant 0 : index
      %c0_14 = arith.constant 0 : index
      %38 = vector.load %arg5[%c0_13, %c0_14] : memref<8x128xf32, #tpu.memory_space<vmem>>, vector<8x128xf32>
      %39 = arith.subf %37, %38 : vector<8x128xf32>
      %40 = arith.mulf %39, %39 : vector<8x128xf32>
      %cst_15 = arith.constant 0.000000e+00 : f32
      %41 = vector.broadcast %cst_15 : f32 to vector<8x128xf32>
      %42 = arith.select %24, %36, %41 : vector<8x128xi1>, vector<8x128xf32>
      %cst_16 = arith.constant 0.000000e+00 : f32
      %43 = vector.broadcast %cst_16 : f32 to vector<8x128xf32>
      %44 = arith.select %24, %40, %43 : vector<8x128xi1>, vector<8x128xf32>
      %c0_17 = arith.constant 0 : index
      %c0_18 = arith.constant 0 : index
      %45 = vector.load %arg7[%c0_17, %c0_18] : memref<8x128xf32, #tpu.memory_space<vmem>>, vector<8x128xf32>
      %46 = vector.shape_cast %42 : vector<8x128xf32> to vector<1x8x128xf32>
      %cst_19 = arith.constant dense<0.000000e+00> : vector<8x128xf32>
      %47 = vector.multi_reduction <add>, %46, %cst_19 [0] : vector<1x8x128xf32> to vector<8x128xf32>
      %48 = arith.addf %45, %47 : vector<8x128xf32>
      %c0_20 = arith.constant 0 : index
      %c0_21 = arith.constant 0 : index
      %49 = vector.load %arg7[%c0_20, %c0_21] : memref<8x128xf32, #tpu.memory_space<vmem>>, vector<8x128xf32>
      tpu.vector_store %arg7[%c0_20, %c0_21], %48 {strides = array<i32>} : memref<8x128xf32, #tpu.memory_space<vmem>>, vector<8x128xf32>,
      %c0_22 = arith.constant 0 : index
      %c0_23 = arith.constant 0 : index
      %50 = vector.load %arg8[%c0_22, %c0_23] : memref<8x128xf32, #tpu.memory_space<vmem>>, vector<8x128xf32>
      %51 = vector.shape_cast %44 : vector<8x128xf32> to vector<1x8x128xf32>
      %cst_24 = arith.constant dense<0.000000e+00> : vector<8x128xf32>
      %52 = vector.multi_reduction <add>, %51, %cst_24 [0] : vector<1x8x128xf32> to vector<8x128xf32>
      %53 = arith.addf %50, %52 : vector<8x128xf32>
      %c0_25 = arith.constant 0 : index
      %c0_26 = arith.constant 0 : index
      %54 = vector.load %arg8[%c0_25, %c0_26] : memref<8x128xf32, #tpu.memory_space<vmem>>, vector<8x128xf32>
      tpu.vector_store %arg8[%c0_25, %c0_26], %53 {strides = array<i32>} : memref<8x128xf32, #tpu.memory_space<vmem>>, vector<8x128xf32>,
    } else {
    }
    %true = arith.constant true
    %10 = arith.xori %7, %true : i1
    %11 = arith.extui %10 : i1 to i32
    %c0_i32_3 = arith.constant 0 : i32
    %12 = arith.cmpi ne, %11, %c0_i32_3 : i32
    scf.if %12 {
      %c0 = arith.constant 0 : index
      %c0_6 = arith.constant 0 : index
      %16 = vector.load %arg2[%c0, %c0_6] : memref<8x128xf32, #tpu.memory_space<vmem>>, vector<8x128xf32>
      %c0_7 = arith.constant 0 : index
      %c0_8 = arith.constant 0 : index
      %17 = vector.load %arg3[%c0_7, %c0_8] : memref<8x128xf32, #tpu.memory_space<vmem>>, vector<8x128xf32>
      %cst = arith.constant 0.000000e+00 : f32
      %18 = vector.broadcast %cst : f32 to vector<8x128xf32>
      %19 = arith.maximumf %16, %18 : vector<8x128xf32>
      %20 = arith.mulf %16, %17 : vector<8x128xf32>
      %21 = arith.subf %19, %20 : vector<8x128xf32>
      %22 = math.absf %16 : vector<8x128xf32>
      %cst_9 = arith.constant 0.000000e+00 : f32
      %23 = vector.broadcast %cst_9 : f32 to vector<8x128xf32>
      %24 = arith.subf %23, %22 : vector<8x128xf32>
      %25 = math.exp %24 : vector<8x128xf32>
      %26 = math.log1p %25 : vector<8x128xf32>
      %27 = arith.addf %21, %26 : vector<8x128xf32>
      %c0_10 = arith.constant 0 : index
      %c0_11 = arith.constant 0 : index
      %28 = vector.load %arg4[%c0_10, %c0_11] : memref<8x128xf32, #tpu.memory_space<vmem>>, vector<8x128xf32>
      %c0_12 = arith.constant 0 : index
      %c0_13 = arith.constant 0 : index
      %29 = vector.load %arg5[%c0_12, %c0_13] : memref<8x128xf32, #tpu.memory_space<vmem>>, vector<8x128xf32>
      %30 = arith.subf %28, %29 : vector<8x128xf32>
      %31 = arith.mulf %30, %30 : vector<8x128xf32>
      %c0_14 = arith.constant 0 : index
      %c0_15 = arith.constant 0 : index
      %32 = vector.load %arg7[%c0_14, %c0_15] : memref<8x128xf32, #tpu.memory_space<vmem>>, vector<8x128xf32>
      %33 = vector.shape_cast %27 : vector<8x128xf32> to vector<1x8x128xf32>
      %cst_16 = arith.constant dense<0.000000e+00> : vector<8x128xf32>
      %34 = vector.multi_reduction <add>, %33, %cst_16 [0] : vector<1x8x128xf32> to vector<8x128xf32>
      %35 = arith.addf %32, %34 : vector<8x128xf32>
      %c0_17 = arith.constant 0 : index
      %c0_18 = arith.constant 0 : index
      %36 = vector.load %arg7[%c0_17, %c0_18] : memref<8x128xf32, #tpu.memory_space<vmem>>, vector<8x128xf32>
      tpu.vector_store %arg7[%c0_17, %c0_18], %35 {strides = array<i32>} : memref<8x128xf32, #tpu.memory_space<vmem>>, vector<8x128xf32>,
      %c0_19 = arith.constant 0 : index
      %c0_20 = arith.constant 0 : index
      %37 = vector.load %arg8[%c0_19, %c0_20] : memref<8x128xf32, #tpu.memory_space<vmem>>, vector<8x128xf32>
      %38 = vector.shape_cast %31 : vector<8x128xf32> to vector<1x8x128xf32>
      %cst_21 = arith.constant dense<0.000000e+00> : vector<8x128xf32>
      %39 = vector.multi_reduction <add>, %38, %cst_21 [0] : vector<1x8x128xf32> to vector<8x128xf32>
      %40 = arith.addf %37, %39 : vector<8x128xf32>
      %c0_22 = arith.constant 0 : index
      %c0_23 = arith.constant 0 : index
      %41 = vector.load %arg8[%c0_22, %c0_23] : memref<8x128xf32, #tpu.memory_space<vmem>>, vector<8x128xf32>
      tpu.vector_store %arg8[%c0_22, %c0_23], %40 {strides = array<i32>} : memref<8x128xf32, #tpu.memory_space<vmem>>, vector<8x128xf32>,
    } else {
    }
    %c0_i32_4 = arith.constant 0 : i32
    %13 = arith.cmpi eq, %arg1, %c0_i32_4 : i32
    %14 = arith.extui %13 : i1 to i32
    %c0_i32_5 = arith.constant 0 : i32
    %15 = arith.cmpi ne, %14, %c0_i32_5 : i32
    scf.if %15 {
      %c0 = arith.constant 0 : index
      %c0_6 = arith.constant 0 : index
      %16 = vector.load %arg7[%c0, %c0_6] : memref<8x128xf32, #tpu.memory_space<vmem>>, vector<8x128xf32>
      %17 = vector.shape_cast %16 : vector<8x128xf32> to vector<1x8x128xf32>
      %cst = arith.constant dense<0.000000e+00> : vector<1xf32>
      %18 = vector.multi_reduction <add>, %17, %cst [1, 2] : vector<1x8x128xf32> to vector<1xf32>
      %19 = vector.shape_cast %18 : vector<1xf32> to vector<1x1x1xf32>
      %20 = vector.extract %19[0, 0, 0] : f32 from vector<1x1x1xf32>
      %c0_7 = arith.constant 0 : index
      %c0_8 = arith.constant 0 : index
      %21 = vector.load %arg8[%c0_7, %c0_8] : memref<8x128xf32, #tpu.memory_space<vmem>>, vector<8x128xf32>
      %22 = vector.shape_cast %21 : vector<8x128xf32> to vector<1x8x128xf32>
      %cst_9 = arith.constant dense<0.000000e+00> : vector<1xf32>
      %23 = vector.multi_reduction <add>, %22, %cst_9 [1, 2] : vector<1x8x128xf32> to vector<1xf32>
      %24 = vector.shape_cast %23 : vector<1xf32> to vector<1x1x1xf32>
      %25 = vector.extract %24[0, 0, 0] : f32 from vector<1x1x1xf32>
      %26 = tpu.iota {dimensions = array<i32: 2>} : vector<1x8x128xi32>
      %c0_i32_10 = arith.constant 0 : i32
      %27 = vector.broadcast %c0_i32_10 : i32 to vector<1x8x128xi32>
      %28 = arith.cmpi eq, %26, %27 : vector<1x8x128xi32>
      %cst_11 = arith.constant 0.000000e+00 : f32
      %29 = vector.broadcast %20 : f32 to vector<1x8x128xf32>
      %30 = vector.broadcast %cst_11 : f32 to vector<1x8x128xf32>
      %31 = arith.select %28, %29, %30 : vector<1x8x128xi1>, vector<1x8x128xf32>
      %c1_i32_12 = arith.constant 1 : i32
      %32 = vector.broadcast %c1_i32_12 : i32 to vector<1x8x128xi32>
      %33 = arith.cmpi eq, %26, %32 : vector<1x8x128xi32>
      %34 = vector.broadcast %25 : f32 to vector<1x8x128xf32>
      %35 = arith.select %33, %34, %31 : vector<1x8x128xi1>, vector<1x8x128xf32>
      %c0_13 = arith.constant 0 : index
      %c0_14 = arith.constant 0 : index
      %c0_15 = arith.constant 0 : index
      %36 = vector.load %arg6[%c0_13, %c0_14, %c0_15] : memref<1x8x128xf32, #tpu.memory_space<vmem>>, vector<1x8x128xf32>
      tpu.vector_store %arg6[%c0_13, %c0_14, %c0_15], %35 {strides = array<i32>} : memref<1x8x128xf32, #tpu.memory_space<vmem>>, vector<1x8x128xf32>,
    } else {
    }
    return
  }
  func.func @transform_0(%arg0: i32, %arg1: i32) -> (i32, i32) {
    %c1_i32 = arith.constant 1 : i32
    %0 = arith.muli %arg0, %c1_i32 : i32
    %1 = arith.addi %0, %arg1 : i32
    %c0_i32 = arith.constant 0 : i32
    %2 = arith.minsi %1, %c0_i32 : i32
    %c0_i32_0 = arith.constant 0 : i32
    %c0_i32_1 = arith.constant 0 : i32
    return %2, %c0_i32_0 : i32, i32
  }
  func.func @transform_1(%arg0: i32, %arg1: i32) -> (i32, i32) {
    %c1_i32 = arith.constant 1 : i32
    %0 = arith.muli %arg0, %c1_i32 : i32
    %1 = arith.addi %0, %arg1 : i32
    %c0_i32 = arith.constant 0 : i32
    %2 = arith.minsi %1, %c0_i32 : i32
    %c0_i32_0 = arith.constant 0 : i32
    %c0_i32_1 = arith.constant 0 : i32
    return %2, %c0_i32_0 : i32, i32
  }
  func.func @transform_2(%arg0: i32, %arg1: i32) -> (i32, i32) {
    %c1_i32 = arith.constant 1 : i32
    %0 = arith.muli %arg0, %c1_i32 : i32
    %1 = arith.addi %0, %arg1 : i32
    %c0_i32 = arith.constant 0 : i32
    %2 = arith.minsi %1, %c0_i32 : i32
    %c0_i32_0 = arith.constant 0 : i32
    %c0_i32_1 = arith.constant 0 : i32
    return %2, %c0_i32_0 : i32, i32
  }
  func.func @transform_3(%arg0: i32, %arg1: i32) -> (i32, i32) {
    %c1_i32 = arith.constant 1 : i32
    %0 = arith.muli %arg0, %c1_i32 : i32
    %1 = arith.addi %0, %arg1 : i32
    %c0_i32 = arith.constant 0 : i32
    %2 = arith.minsi %1, %c0_i32 : i32
    %c0_i32_0 = arith.constant 0 : i32
    %c0_i32_1 = arith.constant 0 : i32
    return %2, %c0_i32_0 : i32, i32
  }
  func.func @transform_4(%arg0: i32, %arg1: i32) -> (i32, i32, i32) {
    %c0_i32 = arith.constant 0 : i32
    %c0_i32_0 = arith.constant 0 : i32
    %c0_i32_1 = arith.constant 0 : i32
    return %arg0, %c0_i32, %c0_i32_0 : i32, i32, i32
  }
}

</mosaic_0001>

<llo_original>
// kernel: tpu_custom_call.1
$region0: #{tpu_custom_call.1}
  #allocation0 [shape = 'u32[]', space=smem, size = 0x4, offset = 0x4, fixed_abs, tag = 'smem constant byte address 0x4 - core index']
  #allocation1 [shape = 'u32[144,128]{1,0:T(1,128)}', space=vmem, size = 0x12000, scoped, tag = 'internal scratch']
  #allocation2 [shape = 'f32[8,128]{1,0:T(8,128)}', space=vmem, size = 0x1000, scoped, tag = 'scratch operand']
  #allocation3 [shape = 'f32[8,128]{1,0:T(8,128)}', space=vmem, size = 0x1000, scoped, tag = 'scratch operand']
  %s0 = inlined_call_operand.hbm [shape: f32[8,128], index: 0, kind: input, shape index: {}]
  %s1 = inlined_call_operand.hbm [shape: f32[8,128], index: 1, kind: input, shape index: {}]
  %s2 = inlined_call_operand.hbm [shape: f32[8,128], index: 2, kind: input, shape index: {}]
  %s3 = inlined_call_operand.vmem [shape: f32[8,128], index: 3, kind: input, shape index: {}]
  %s4 = inlined_call_operand.hbm [shape: f32[2,8,128], index: 4, kind: output, shape index: {}]
  %s5 = sld [smem:[#allocation0]]
  $region77: #{tpu_custom_call.1} parent=0
    _
  %s7 = ssub.s32 1, %s5
  %s8 = scalar_select 0, %s7, %s5
  $region1: #{tpu_custom_call.1} parent=0
    #allocation4 [shape = 'u8[8192]{0}', space=vmem, size = 0x2000, scoped, tag = 'input window, operand 0']
    #allocation5 [shape = 's32[2]{0}', space=sflag, size = 0x8, scoped, tag = 'scoped memory for tpu_custom_call.1']
    #allocation6 [shape = 's32[2]{0}', space=sflag, size = 0x8, scoped, tag = 'scoped memory for tpu_custom_call.1']
    #allocation7 [shape = 'u8[8192]{0}', space=vmem, size = 0x2000, scoped, tag = 'input window, operand 1']
    #allocation8 [shape = 's32[2]{0}', space=sflag, size = 0x8, scoped, tag = 'scoped memory for tpu_custom_call.1']
    #allocation9 [shape = 'u8[8192]{0}', space=vmem, size = 0x2000, scoped, tag = 'input window, operand 2']
    #allocation10 [shape = 'u8[8192]{0}', space=vmem, size = 0x2000, scoped, tag = 'output window, operand 0']
    %9 = vsyncpa [#allocation5], 0
    %s10 = scalar_lea.sflag [#allocation5], 1
    %11 = vsyncpa %s10, 0
    %12 = vsyncpa [#allocation8], 0
    %s13 = scalar_lea.sflag [#allocation8], 1
    %14 = vsyncpa %s13, 0
    %15 = vsyncpa [#allocation6], 0
    %s16 = scalar_lea.sflag [#allocation6], 1
    %17 = vsyncpa %s16, 0
    loop: start=0, step=1, limit=4
    $region2: #{tpu_custom_call.1} parent=1 // loop_pre_header
      _
    $region3: #{tpu_custom_call.1} parent=1 // loop_header
      %s19 = sphi 0, %s23
      %p20 = scmp.ge.s32.totalorder %s19, 4
      %s26 = sphi 0, %s38
      %s27 = sphi 0, %s34
      %s28 = sphi 0, %s26
      %s29 = sphi 0, %s27
      %s30 = sphi 0, %s28
      %s31 = sphi 0, %s29
      %s47 = sphi 0, %s49
      %s50 = sphi 0, %s47
      %s51 = sphi 0, %s50
      %s67 = sphi 0, %s51
      %s79 = sphi 0, %s81
      %s82 = sphi 0, %s79
      %s83 = sphi 0, %s82
      %s99 = sphi 0, %s83
      %s111 = sphi 0, %s113
      %s114 = sphi 0, %s111
      %s115 = sphi 0, %s114
      %s131 = sphi 0, %s115
      %s143 = sphi 0, %s145
      %s146 = sphi 0, %s143
      %s147 = sphi 0, %s146
      %s163 = sphi 0, %s147
      %s169 = sphi 0, %s171
      %s172 = sphi 0, %s169
      %s173 = sphi 0, %s172
      %s189 = sphi 0, %s173
    $region4: #{tpu_custom_call.1} parent=1 // loop_header_branch
      %22 = sbr.rel (%p20) target = $region8
    $region5: #{tpu_custom_call.1} parent=1 // loop_body
      %s24 = ssub.s32 %s19, 1
      %s25 = ssub.s32 %s19, 2
      %s32 = sadd.s32 1, %s27
      %p33 = scmp.ge.s32.totalorder %s32, 1
      %s34 = scalar_select %p33, 0, %s32
      %s35 = sadd.s32 1, %s26
      %s36 = scalar_select %p33, %s35, %s26
      %p37 = scmp.ge.s32.totalorder %s36, 2
      %s38 = scalar_select %p37, 0, %s36
      %s39 = sadd.s32 %s26, %s27
      %p40 = scmp.lt.s32.totalorder %s39, 0
      %s41 = scalar_select %p40, %s39, 0
      %s42 = sadd.s32 %s38, %s34
      %p43 = scmp.lt.s32.totalorder %s42, 0
      %s44 = scalar_select %p43, %s42, 0
      %s45 = ssub.s32 %s41, %s44
      %p46 = scmp.eq.s32.totalorder %s45, 0
      %s48 = sadd.s32 %s47, 1
      %s49 = scalar_select %p46, %s47, %s48
      %p52 = pneg %p46
      %p53 = scmp.eq.s32.totalorder %s19, 1
      %p54 = por %p52, %p53
      %p55 = scmp.ne.s32.totalorder %s47, %s50
      %p56 = scmp.eq.s32.totalorder %s19, 0
      %p57 = por %p55, %p56
      %p58 = scmp.ne.s32.totalorder %s47, %s50
      %p59 = scmp.eq.s32.totalorder %s24, 1
      %p60 = por %p58, %p59
      %p61 = scmp.ne.s32.totalorder %s50, %s51
      %p62 = scmp.eq.s32.totalorder %s24, 0
      %p63 = por %p61, %p62
      %p64 = scmp.ne.s32.totalorder %s50, %s51
      %p65 = scmp.eq.s32.totalorder %s25, 1
      %p66 = por %p64, %p65
      %p68 = scmp.ne.s32.totalorder %s51, %s67
      %p69 = scmp.eq.s32.totalorder %s25, 0
      %p70 = por %p68, %p69
      %s71 = sadd.s32 %s26, %s27
      %p72 = scmp.lt.s32.totalorder %s71, 0
      %s73 = scalar_select %p72, %s71, 0
      %s74 = sadd.s32 %s38, %s34
      %p75 = scmp.lt.s32.totalorder %s74, 0
      %s76 = scalar_select %p75, %s74, 0
      %s77 = ssub.s32 %s73, %s76
      %p78 = scmp.eq.s32.totalorder %s77, 0
      %s80 = sadd.s32 %s79, 1
      %s81 = scalar_select %p78, %s79, %s80
      %p84 = pneg %p78
      %p85 = scmp.eq.s32.totalorder %s19, 1
      %p86 = por %p84, %p85
      %p87 = scmp.ne.s32.totalorder %s79, %s82
      %p88 = scmp.eq.s32.totalorder %s19, 0
      %p89 = por %p87, %p88
      %p90 = scmp.ne.s32.totalorder %s79, %s82
      %p91 = scmp.eq.s32.totalorder %s24, 1
      %p92 = por %p90, %p91
      %p93 = scmp.ne.s32.totalorder %s82, %s83
      %p94 = scmp.eq.s32.totalorder %s24, 0
      %p95 = por %p93, %p94
      %p96 = scmp.ne.s32.totalorder %s82, %s83
      %p97 = scmp.eq.s32.totalorder %s25, 1
      %p98 = por %p96, %p97
      %p100 = scmp.ne.s32.totalorder %s83, %s99
      %p101 = scmp.eq.s32.totalorder %s25, 0
      %p102 = por %p100, %p101
      %s103 = sadd.s32 %s26, %s27
      %p104 = scmp.lt.s32.totalorder %s103, 0
      %s105 = scalar_select %p104, %s103, 0
      %s106 = sadd.s32 %s38, %s34
      %p107 = scmp.lt.s32.totalorder %s106, 0
      %s108 = scalar_select %p107, %s106, 0
      %s109 = ssub.s32 %s105, %s108
      %p110 = scmp.eq.s32.totalorder %s109, 0
      %s112 = sadd.s32 %s111, 1
      %s113 = scalar_select %p110, %s111, %s112
      %p116 = pneg %p110
      %p117 = scmp.eq.s32.totalorder %s19, 1
      %p118 = por %p116, %p117
      %p119 = scmp.ne.s32.totalorder %s111, %s114
      %p120 = scmp.eq.s32.totalorder %s19, 0
      %p121 = por %p119, %p120
      %p122 = scmp.ne.s32.totalorder %s111, %s114
      %p123 = scmp.eq.s32.totalorder %s24, 1
      %p124 = por %p122, %p123
      %p125 = scmp.ne.s32.totalorder %s114, %s115
      %p126 = scmp.eq.s32.totalorder %s24, 0
      %p127 = por %p125, %p126
      %p128 = scmp.ne.s32.totalorder %s114, %s115
      %p129 = scmp.eq.s32.totalorder %s25, 1
      %p130 = por %p128, %p129
      %p132 = scmp.ne.s32.totalorder %s115, %s131
      %p133 = scmp.eq.s32.totalorder %s25, 0
      %p134 = por %p132, %p133
      %s135 = sadd.s32 %s26, %s27
      %p136 = scmp.lt.s32.totalorder %s135, 0
      %s137 = scalar_select %p136, %s135, 0
      %s138 = sadd.s32 %s38, %s34
      %p139 = scmp.lt.s32.totalorder %s138, 0
      %s140 = scalar_select %p139, %s138, 0
      %s141 = ssub.s32 %s137, %s140
      %p142 = scmp.eq.s32.totalorder %s141, 0
      %s144 = sadd.s32 %s143, 1
      %s145 = scalar_select %p142, %s143, %s144
      %p148 = pneg %p142
      %p149 = scmp.eq.s32.totalorder %s19, 1
      %p150 = por %p148, %p149
      %p151 = scmp.ne.s32.totalorder %s143, %s146
      %p152 = scmp.eq.s32.totalorder %s19, 0
      %p153 = por %p151, %p152
      %p154 = scmp.ne.s32.totalorder %s143, %s146
      %p155 = scmp.eq.s32.totalorder %s24, 1
      %p156 = por %p154, %p155
      %p157 = scmp.ne.s32.totalorder %s146, %s147
      %p158 = scmp.eq.s32.totalorder %s24, 0
      %p159 = por %p157, %p158
      %p160 = scmp.ne.s32.totalorder %s146, %s147
      %p161 = scmp.eq.s32.totalorder %s25, 1
      %p162 = por %p160, %p161
      %p164 = scmp.ne.s32.totalorder %s147, %s163
      %p165 = scmp.eq.s32.totalorder %s25, 0
      %p166 = por %p164, %p165
      %s167 = ssub.s32 %s26, %s38
      %p168 = scmp.eq.s32.totalorder %s167, 0
      %s170 = sadd.s32 %s169, 1
      %s171 = scalar_select %p168, %s169, %s170
      %p174 = pneg %p168
      %p175 = scmp.eq.s32.totalorder %s19, 1
      %p176 = por %p174, %p175
      %p177 = scmp.ne.s32.totalorder %s169, %s172
      %p178 = scmp.eq.s32.totalorder %s19, 0
      %p179 = por %p177, %p178
      %p180 = scmp.ne.s32.totalorder %s169, %s172
      %p181 = scmp.eq.s32.totalorder %s24, 1
      %p182 = por %p180, %p181
      %p183 = scmp.ne.s32.totalorder %s172, %s173
      %p184 = scmp.eq.s32.totalorder %s24, 0
      %p185 = por %p183, %p184
      %p186 = scmp.ne.s32.totalorder %s172, %s173
      %p187 = scmp.eq.s32.totalorder %s25, 1
      %p188 = por %p186, %p187
      %p190 = scmp.ne.s32.totalorder %s173, %s189
      %p191 = scmp.eq.s32.totalorder %s25, 0
      %p192 = por %p190, %p191
      %p193 = scmp.le.s32.totalorder 1, %s19
      %p194 = scmp.lt.s32.totalorder %s19, 3
      %p195 = pnand %p193, %p194
      %p196 = pneg %p195
      // Predicated region
      $region9: #{tpu_custom_call.1} parent=5 // pred_check
        _
      $region10: #{tpu_custom_call.1} parent=5 // pred_check_branch
        %198 = sbr.rel (%p195) target = $region12
      $region11: #{tpu_custom_call.1} parent=5 // pred_region
        %s199 = ssub.s32 %s19, 1
      $region12: #{tpu_custom_call.1} parent=5 // pred_fallthru
        _
      %p200 = scmp.lt.s32.totalorder %s19, 2
      // Predicated region
      $region13: #{tpu_custom_call.1} parent=5 // pred_check
        %p201 = pneg %p200
      $region14: #{tpu_custom_call.1} parent=5 // pred_check_branch
        %203 = sbr.rel (%p201) target = $region16
      $region15: #{tpu_custom_call.1} parent=5 // pred_region
        // Predicated region
        $region17: #{tpu_custom_call.1} parent=15 // pred_check
          %p204 = pneg %p57
        $region18: #{tpu_custom_call.1} parent=15 // pred_check_branch
          %206 = sbr.rel (%p204) target = $region20
        $region19: #{tpu_custom_call.1} parent=15 // pred_region
          %s207 = sand.u32 %s47, 1
          %s208 = scalar_lea.sflag [#allocation5], %s207
          %s209 = sand.u32 %s47, 1
          %s210 = smul.addr %s209, 8
          %s211 = scalar_lea.vmem [#allocation4], %s210
          %s212 = sadd.s32 %s26, %s27
          %p213 = scmp.lt.s32.totalorder %s212, 0
          %s214 = scalar_select %p213, %s212, 0
          %s216 = ssub.s32 128, 128
          %217 = vsyncadd %s208, %s216
          %s218 = smul.addr %s214, 128
          %s219 = scalar_lea.hbm %s0, %s218
          %s221 = sshll.u32 %s211, 4
          %s222 = int_to_ptr.vmem [resolvable:$true] %s221
          %224 = dma.hbm_to_vmem [thread:$0]  %s219, 128, %s222, %s208
        $region20: #{tpu_custom_call.1} parent=15 // pred_fallthru
          _
        // Predicated region
        $region21: #{tpu_custom_call.1} parent=15 // pred_check
          %p225 = pneg %p89
        $region22: #{tpu_custom_call.1} parent=15 // pred_check_branch
          %227 = sbr.rel (%p225) target = $region24
        $region23: #{tpu_custom_call.1} parent=15 // pred_region
          %s228 = sand.u32 %s19, 1
          %s229 = scalar_lea.sflag [#allocation8], %s228
          %s230 = sand.u32 %s79, 1
          %s231 = smul.addr %s230, 8
          %s232 = scalar_lea.vmem [#allocation7], %s231
          %s233 = sadd.s32 %s26, %s27
          %p234 = scmp.lt.s32.totalorder %s233, 0
          %s235 = scalar_select %p234, %s233, 0
          %s237 = ssub.s32 128, 128
          %238 = vsyncadd %s229, %s237
          %s239 = smul.addr %s235, 128
          %s240 = scalar_lea.hbm %s1, %s239
          %s242 = sshll.u32 %s232, 4
          %s243 = int_to_ptr.vmem [resolvable:$true] %s242
          %245 = dma.hbm_to_vmem [thread:$0]  %s240, 128, %s243, %s229
        $region24: #{tpu_custom_call.1} parent=15 // pred_fallthru
          _
        // Predicated region
        $region25: #{tpu_custom_call.1} parent=15 // pred_check
          %p246 = pneg %p121
        $region26: #{tpu_custom_call.1} parent=15 // pred_check_branch
          %248 = sbr.rel (%p246) target = $region28
        $region27: #{tpu_custom_call.1} parent=15 // pred_region
          %s249 = sand.u32 %s19, 1
          %s250 = scalar_lea.sflag [#allocation8], %s249
          %s251 = sand.u32 %s111, 1
          %s252 = smul.addr %s251, 8
          %s253 = scalar_lea.vmem [#allocation9], %s252
          %s254 = sadd.s32 %s26, %s27
          %p255 = scmp.lt.s32.totalorder %s254, 0
          %s256 = scalar_select %p255, %s254, 0
          %s258 = ssub.s32 128, 128
          %259 = vsyncadd %s250, %s258
          %s260 = smul.addr %s256, 128
          %s261 = scalar_lea.hbm %s2, %s260
          %s263 = sshll.u32 %s253, 4
          %s264 = int_to_ptr.vmem [resolvable:$true] %s263
          %266 = dma.hbm_to_vmem [thread:$0]  %s261, 128, %s264, %s250
        $region28: #{tpu_custom_call.1} parent=15 // pred_fallthru
          _
        // Predicated region
        $region29: #{tpu_custom_call.1} parent=15 // pred_check
          %p267 = pneg %p153
        $region30: #{tpu_custom_call.1} parent=15 // pred_check_branch
          %269 = sbr.rel (%p267) target = $region32
        $region31: #{tpu_custom_call.1} parent=15 // pred_region
          %s270 = sadd.s32 %s26, %s27
          %p271 = scmp.lt.s32.totalorder %s270, 0
          %s272 = scalar_select %p271, %s270, 0
          %p273 = scmp.lt.s32.totalorder %s272, 0
          %s274 = scalar_select %p273, %s272, 0
          %s275 = smul.addr %s274, 8
          %s276 = scalar_lea.vmem %s3, %s275
          %s277 = sadd.s32 %s26, %s27
          %p278 = scmp.lt.s32.totalorder %s277, 0
          %s279 = scalar_select %p278, %s277, 0
        $region32: #{tpu_custom_call.1} parent=15 // pred_fallthru
          _
      $region16: #{tpu_custom_call.1} parent=5 // pred_fallthru
        _
      %p280 = scmp.le.s32.totalorder 1, %s19
      %p281 = scmp.lt.s32.totalorder %s19, 3
      %p282 = pnand %p280, %p281
      %p283 = pneg %p282
      // Predicated region
      $region33: #{tpu_custom_call.1} parent=5 // pred_check
        _
      $region34: #{tpu_custom_call.1} parent=5 // pred_check_branch
        %285 = sbr.rel (%p282) target = $region36
      $region35: #{tpu_custom_call.1} parent=5 // pred_region
        %s286 = ssub.s32 %s19, 1
        %s287 = sand.u32 %s50, 1
        %s288 = scalar_lea.sflag [#allocation5], %s287
        %s289 = sand.u32 %s50, 1
        %s290 = smul.addr %s289, 8
        %s291 = scalar_lea.vmem [#allocation4], %s290
        // Predicated region
        $region37: #{tpu_custom_call.1} parent=35 // pred_check
          %p292 = pneg %p63
        $region38: #{tpu_custom_call.1} parent=35 // pred_check_branch
          %294 = sbr.rel (%p292) target = $region40
        $region39: #{tpu_custom_call.1} parent=35 // pred_region
          %295 = dma.done %s288, 128
        $region40: #{tpu_custom_call.1} parent=35 // pred_fallthru
          _
        %s296 = sand.u32 %s24, 1
        %s297 = scalar_lea.sflag [#allocation8], %s296
        %s298 = sand.u32 %s82, 1
        %s299 = smul.addr %s298, 8
        %s300 = scalar_lea.vmem [#allocation7], %s299
        // Predicated region
        $region41: #{tpu_custom_call.1} parent=35 // pred_check
          %p301 = pneg %p95
        $region42: #{tpu_custom_call.1} parent=35 // pred_check_branch
          %303 = sbr.rel (%p301) target = $region44
        $region43: #{tpu_custom_call.1} parent=35 // pred_region
          %304 = dma.done %s297, 128
        $region44: #{tpu_custom_call.1} parent=35 // pred_fallthru
          _
        %s305 = sand.u32 %s24, 1
        %s306 = scalar_lea.sflag [#allocation8], %s305
        %s307 = sand.u32 %s114, 1
        %s308 = smul.addr %s307, 8
        %s309 = scalar_lea.vmem [#allocation9], %s308
        // Predicated region
        $region45: #{tpu_custom_call.1} parent=35 // pred_check
          %p310 = pneg %p127
        $region46: #{tpu_custom_call.1} parent=35 // pred_check_branch
          %312 = sbr.rel (%p310) target = $region48
        $region47: #{tpu_custom_call.1} parent=35 // pred_region
          %313 = dma.done %s306, 128
        $region48: #{tpu_custom_call.1} parent=35 // pred_fallthru
          _
        %s314 = sand.u32 %s50, 1
        %s315 = scalar_lea.sflag [#allocation5], %s314
        %s316 = sand.u32 %s50, 1
        %s317 = smul.addr %s316, 8
        %s318 = scalar_lea.vmem [#allocation4], %s317
        %p319 = pneg %p63
        %p320 = pneg %p60
        %s321 = sand.u32 %s24, 1
        %s322 = scalar_lea.sflag [#allocation8], %s321
        %s323 = sand.u32 %s82, 1
        %s324 = smul.addr %s323, 8
        %s325 = scalar_lea.vmem [#allocation7], %s324
        %p326 = pneg %p95
        %p327 = pneg %p92
        %s328 = sand.u32 %s24, 1
        %s329 = scalar_lea.sflag [#allocation8], %s328
        %s330 = sand.u32 %s114, 1
        %s331 = smul.addr %s330, 8
        %s332 = scalar_lea.vmem [#allocation9], %s331
        %p333 = pneg %p127
        %p334 = pneg %p124
        %s335 = sadd.s32 %s28, %s29
        %p336 = scmp.lt.s32.totalorder %s335, 0
        %s337 = scalar_select %p336, %s335, 0
        %p338 = scmp.lt.s32.totalorder %s337, 0
        %s339 = scalar_select %p338, %s337, 0
        %s340 = smul.addr %s339, 8
        %s341 = scalar_lea.vmem %s3, %s340
        %p342 = pneg %p159
        %p343 = pneg %p156
        %p344 = pneg %p185
        %p345 = pneg %p182
        %s346 = sand.u32 %s172, 1
        %s347 = scalar_lea.sflag [#allocation6], %s346
        %s348 = sand.u32 %s172, 1
        %s349 = smul.addr %s348, 8
        %s350 = scalar_lea.vmem [#allocation10], %s349
        %s351 = sadd.s32 %s28, %s29
        %p352 = scmp.lt.s32.totalorder %s351, 0
        %s353 = scalar_select %p352, %s351, 0
        %s354 = sadd.s32 %s28, %s29
        %p355 = scmp.lt.s32.totalorder %s354, 0
        %s356 = scalar_select %p355, %s354, 0
        %s357 = sadd.s32 %s28, %s29
        %p358 = scmp.lt.s32.totalorder %s357, 0
        %s359 = scalar_select %p358, %s357, 0
        %s360 = sadd.s32 %s28, %s29
        %p361 = scmp.lt.s32.totalorder %s360, 0
        %s362 = scalar_select %p361, %s360, 0
        %p363 = scmp.lt.s32.totalorder %s362, 0
        %s364 = scalar_select %p363, %s362, 0
        %s365 = smul.addr %s364, 8
        %s366 = scalar_lea.vmem %s3, %s365
        %s367 = sadd.s32 %s28, %s29
        %p368 = scmp.lt.s32.totalorder %s367, 0
        %s369 = scalar_select %p368, %s367, 0
        %p370 = scmp.eq.s32.totalorder %s29, 0
        // Predicated region
        $region49: #{tpu_custom_call.1} parent=35 // pred_check
          %p371 = pneg %p370
        $region50: #{tpu_custom_call.1} parent=35 // pred_check_branch
          %373 = sbr.rel (%p371) target = $region52
        $region51: #{tpu_custom_call.1} parent=35 // pred_region
          %374 = vst [vmem:[#allocation2] sm:$0xff] 0.0
          %375 = vst [vmem:[#allocation3] sm:$0xff] 0.0
        $region52: #{tpu_custom_call.1} parent=35 // pred_fallthru
          _
        %s376 = sadd.s32 %s28, %s29
        %s377 = smul.u32 %s376, 1024
        %s378 = sadd.s32 %s377, 1024
        %p379 = scmp.gt.s32.totalorder %s378, 8
        // Predicated region
        $region53: #{tpu_custom_call.1} parent=35 // pred_check
          %p380 = pneg %p379
        $region54: #{tpu_custom_call.1} parent=35 // pred_check_branch
          %382 = sbr.rel (%p380) target = $region56
        $region55: #{tpu_custom_call.1} parent=35 // pred_region
          %v383 = vlaneseq
          %v384 = vshrl.u32 %v383, 7
          %v385 = vlaneseq
          %v386 = vand.u32 %v385, 127
          %v387 = vmul.u32 %v384, 128
          %v388 = vstv %s377
          %v389 = vadd.s32 %v388, %v387
          %v390 = vadd.s32 %v389, %v386
          %vm391 = vcmp.lt.s32.totalorder %v390, 8
          %v392 = vld [vmem:[%s291] sm:$0xff]
          %v393 = vld [vmem:[%s300] sm:$0xff]
          %v394 = vmax.f32 %v392, 0.0
          %v395 = vmul.f32 %v392, %v393
          %v396 = vsub.f32 %v394, %v395
          %v397 = vand.u32 2147483647, %v392
          %v398 = vsub.f32 0.0, %v397
          %v399 = vmul.f32 %v398, 1.442695
          %v400 = vpow.pop %v399
          %v401 = vadd.f32 %v400, 1.0
          %v402 = vlog2.pop %v401
          %v403 = vmul.f32 %v402, 0.6931472
          %v404 = vmul.f32 -0.5, %v400
          %v405 = vadd.f32 %v404, 1.0
          %v406 = vmul.f32 %v405, %v400
          %v407 = vand.u32 2147483647, %v400
          %vm408 = vcmp.lt.f32.partialorder %v407, 0.0004427343
          %v409 = vsel %vm408, %v406, %v403
          %v410 = vadd.f32 %v396, %v409
          %v411 = vld [vmem:[%s309] sm:$0xff]
          %v412 = vld [vmem:[%s366] sm:$0xff]
          %v413 = vsub.f32 %v411, %v412
          %v414 = vmul.f32 %v413, %v413
          %v415 = vsel %vm391, %v410, 0.0
          %v416 = vsel %vm391, %v414, 0.0
          %v417 = vld [vmem:[#allocation2] sm:$0xff]
          %v418 = vadd.f32 %v415, 0.0
          %v419 = vadd.f32 %v417, %v418
          %420 = vst [vmem:[#allocation2] sm:$0xff] %v419
          %v421 = vld [vmem:[#allocation3] sm:$0xff]
          %v422 = vadd.f32 %v416, 0.0
          %v423 = vadd.f32 %v421, %v422
          %424 = vst [vmem:[#allocation3] sm:$0xff] %v423
        $region56: #{tpu_custom_call.1} parent=35 // pred_fallthru
          _
        %p425 = scmp.le.s32.totalorder %s378, 8
        // Predicated region
        $region57: #{tpu_custom_call.1} parent=35 // pred_check
          %p426 = pneg %p425
        $region58: #{tpu_custom_call.1} parent=35 // pred_check_branch
          %428 = sbr.rel (%p426) target = $region60
        $region59: #{tpu_custom_call.1} parent=35 // pred_region
          %v429 = vld [vmem:[%s291] sm:$0xff]
          %v430 = vld [vmem:[%s300] sm:$0xff]
          %v431 = vmax.f32 %v429, 0.0
          %v432 = vmul.f32 %v429, %v430
          %v433 = vsub.f32 %v431, %v432
          %v434 = vand.u32 2147483647, %v429
          %v435 = vsub.f32 0.0, %v434
          %v436 = vmul.f32 %v435, 1.442695
          %v437 = vpow.pop %v436
          %v438 = vadd.f32 %v437, 1.0
          %v439 = vlog2.pop %v438
          %v440 = vmul.f32 %v439, 0.6931472
          %v441 = vmul.f32 -0.5, %v437
          %v442 = vadd.f32 %v441, 1.0
          %v443 = vmul.f32 %v442, %v437
          %v444 = vand.u32 2147483647, %v437
          %vm445 = vcmp.lt.f32.partialorder %v444, 0.0004427343
          %v446 = vsel %vm445, %v443, %v440
          %v447 = vadd.f32 %v433, %v446
          %v448 = vld [vmem:[%s309] sm:$0xff]
          %v449 = vld [vmem:[%s366] sm:$0xff]
          %v450 = vsub.f32 %v448, %v449
          %v451 = vmul.f32 %v450, %v450
          %v452 = vld [vmem:[#allocation2] sm:$0xff]
          %v453 = vadd.f32 %v447, 0.0
          %v454 = vadd.f32 %v452, %v453
          %455 = vst [vmem:[#allocation2] sm:$0xff] %v454
          %v456 = vld [vmem:[#allocation3] sm:$0xff]
          %v457 = vadd.f32 %v451, 0.0
          %v458 = vadd.f32 %v456, %v457
          %459 = vst [vmem:[#allocation3] sm:$0xff] %v458
        $region60: #{tpu_custom_call.1} parent=35 // pred_fallthru
          _
        // Predicated region
        $region61: #{tpu_custom_call.1} parent=35 // pred_check
          %p460 = pneg %p370
        $region62: #{tpu_custom_call.1} parent=35 // pred_check_branch
          %462 = sbr.rel (%p460) target = $region64
        $region63: #{tpu_custom_call.1} parent=35 // pred_region
          %v463 = vld [vmem:[#allocation2] sm:$0xff]
          %464 = vadd.xlane.f32.xlu0 %v463
          %v465 = vpop.xlane.xlu0 %464
          %v466 = vrot.slane %v465, 4
          %v467 = vadd.f32 %v465, %v466
          %v468 = vrot.slane %v467, 2
          %v469 = vadd.f32 %v467, %v468
          %v470 = vrot.slane %v469, 1
          %v471 = vadd.f32 %v469, %v470
          %s472 = vtos %v471
          %v473 = vld [vmem:[#allocation3] sm:$0xff]
          %474 = vadd.xlane.f32.xlu0 %v473
          %v475 = vpop.xlane.xlu0 %474
          %v476 = vrot.slane %v475, 4
          %v477 = vadd.f32 %v475, %v476
          %v478 = vrot.slane %v477, 2
          %v479 = vadd.f32 %v477, %v478
          %v480 = vrot.slane %v479, 1
          %v481 = vadd.f32 %v479, %v480
          %s482 = vtos %v481
          %v483 = vlaneseq
          %v484 = vand.u32 %v483, 127
          %vm485 = vcmp.eq.s32.totalorder %v484, 0
          %v486 = vstv %s472
          %v487 = vsel %vm485, %v486, 0.0
          %vm488 = vcmp.eq.s32.totalorder %v484, 1
          %v489 = vstv %s482
          %v490 = vsel %vm488, %v489, %v487
          %491 = vst [vmem:[%s350] sm:$0xff] %v490
        $region64: #{tpu_custom_call.1} parent=35 // pred_fallthru
          _
        %s492 = sand.u32 %s172, 1
        %s493 = scalar_lea.sflag [#allocation6], %s492
        %s494 = sand.u32 %s172, 1
        %s495 = smul.addr %s494, 8
        %s496 = scalar_lea.vmem [#allocation10], %s495
        // Predicated region
        $region65: #{tpu_custom_call.1} parent=35 // pred_check
          %p497 = pneg %p182
        $region66: #{tpu_custom_call.1} parent=35 // pred_check_branch
          %499 = sbr.rel (%p497) target = $region68
        $region67: #{tpu_custom_call.1} parent=35 // pred_region
          %s501 = ssub.s32 128, 128
          %502 = vsyncadd %s493, %s501
          %s503 = smul.addr %s28, 128
          %s504 = scalar_lea.hbm %s4, %s503
          %s506 = sshll.u32 %s496, 4
          %s507 = int_to_ptr.vmem [resolvable:$true] %s506
          %509 = dma.vmem_to_hbm [thread:$0]  %s507, 128, %s504, %s493
        $region68: #{tpu_custom_call.1} parent=35 // pred_fallthru
          _
      $region36: #{tpu_custom_call.1} parent=5 // pred_fallthru
        _
      %p510 = scmp.le.s32.totalorder 2, %s19
      // Predicated region
      $region69: #{tpu_custom_call.1} parent=5 // pred_check
        %p511 = pneg %p510
      $region70: #{tpu_custom_call.1} parent=5 // pred_check_branch
        %513 = sbr.rel (%p511) target = $region72
      $region71: #{tpu_custom_call.1} parent=5 // pred_region
        %s514 = ssub.s32 %s19, 2
        // Predicated region
        $region73: #{tpu_custom_call.1} parent=71 // pred_check
          %p515 = pneg %p188
        $region74: #{tpu_custom_call.1} parent=71 // pred_check_branch
          %517 = sbr.rel (%p515) target = $region76
        $region75: #{tpu_custom_call.1} parent=71 // pred_region
          %s518 = sand.u32 %s173, 1
          %s519 = scalar_lea.sflag [#allocation6], %s518
          %s520 = sand.u32 %s173, 1
          %s521 = smul.addr %s520, 8
          %s522 = scalar_lea.vmem [#allocation10], %s521
          %523 = dma.done %s519, 128
        $region76: #{tpu_custom_call.1} parent=71 // pred_fallthru
          _
      $region72: #{tpu_custom_call.1} parent=5 // pred_fallthru
        _
    $region6: #{tpu_custom_call.1} parent=1 // loop_footer
      %s23 = sadd.s32 1, %s19
    $region7: #{tpu_custom_call.1} parent=1 // loop_footer_branch
      %18 = sbr.rel target = $region3
    $region8: #{tpu_custom_call.1} parent=1 // loop_exit
      _
    %524 = vsyncpa [#allocation5], 1
    %s525 = scalar_lea.sflag [#allocation5], 1
    %526 = vsyncpa %s525, 1
    %527 = vsyncpa [#allocation8], 1
    %s528 = scalar_lea.sflag [#allocation8], 1
    %529 = vsyncpa %s528, 1
    %530 = vsyncpa [#allocation6], 1
    %s531 = scalar_lea.sflag [#allocation6], 1
    %532 = vsyncpa %s531, 1

</llo_original>
